<compile_context>
chip_gen: v6e
topology: v6e:2x2x1
jax: 0.10.0
libtpu: 0.0.40
codegen_flags: <defaults>
</compile_context>

<pallas_src>
import functools

import jax
import jax.numpy as jnp
from jax.experimental import pallas as pl
from jax.experimental.pallas import tpu as pltpu


def _round_up(a: int, b: int) -> int:
    return ((a + b - 1) // b) * b


def _mlp_body(x_ref, wgu_ref, wd_ref, acc_ref):
    """One reduction step: fused gate|up matmul, SiLU-gate, partial down-proj."""
    ti = wd_ref.shape[0]  # static block size of the intermediate tile
    x = x_ref[...]
    # Fused gate+up projection: single lane-dense weight tile, single MXU pass
    # of the LHS x per grid step.
    gu = jnp.dot(x, wgu_ref[...], preferred_element_type=jnp.float32)
    g = gu[:, :ti]
    u = gu[:, ti:]
    h = (g * jax.nn.sigmoid(g)) * u  # SiLU(g) * u, in f32
    acc_ref[...] += jnp.dot(
        h.astype(wd_ref.dtype), wd_ref[...], preferred_element_type=jnp.float32
    )


def mlp_kernel_f32_out(x_ref, wgu_ref, wd_ref, o_ref):
    # f32 output: the output block is resident across the reduction axis, so
    # accumulate directly into it (saves a tm x H f32 scratch + epilogue copy).
    @pl.when(pl.program_id(1) == 0)
    def _():
        o_ref[...] = jnp.zeros_like(o_ref)

    _mlp_body(x_ref, wgu_ref, wd_ref, o_ref)


def mlp_kernel_acc(x_ref, wgu_ref, wd_ref, o_ref, acc_ref):
    # Non-f32 (e.g. bf16) output: accumulate in an f32 VMEM scratch, cast once.
    j = pl.program_id(1)

    @pl.when(j == 0)
    def _():
        acc_ref[...] = jnp.zeros_like(acc_ref)

    _mlp_body(x_ref, wgu_ref, wd_ref, acc_ref)

    @pl.when(j == pl.num_programs(1) - 1)
    def _():
        o_ref[...] = acc_ref[...].astype(o_ref.dtype)


@functools.partial(jax.jit, static_argnames=("tm", "ti", "vmem_limit_bytes"))
def mlp_pallas(x, wg_t, wu_t, wd_t, *, tm=None, ti=None,
               vmem_limit_bytes=64 * 1024 * 1024):
    """x: [B, S, H]; wg_t/wu_t: [H, I]; wd_t: [I, H]. Returns [B, S, H]."""
    B, S, H = x.shape
    I = wg_t.shape[1]
    M = B * S

    # Sublane alignment for the row dimension (f32: 8, bf16: 16, int8/fp8: 32).
    sub = max(8, 32 // jnp.dtype(x.dtype).itemsize)

    # ---- tile selection (shapes are static under jit) -----------------------
    if ti is None:
        # ti >= 512 keeps the 256-wide MXU full on v6e/v7x for both matmul
        # stages, while double-buffered bf16 weight tiles still fit v7x's
        # 64 MiB VMEM at realistic H.
        ti = min(512, _round_up(I, 128))
    if tm is None:
        if M >= 2 * sub:
            # Large row tiles, but keep >=2 row tiles so the "parallel" axis
            # can shard across v7x's two TensorCores.
            tm = min(256, _round_up(pl.cdiv(M, 2), sub))
        else:
            tm = _round_up(max(M, 1), sub)

    Mp = _round_up(M, tm)
    Ip = _round_up(I, ti)

    # ---- pad to tile multiples (zero padding is exact: silu(0)*0 = 0) -------
    x2 = x.reshape(M, H)
    if Mp != M:
        x2 = jnp.pad(x2, ((0, Mp - M), (0, 0)))
    if Ip != I:
        wg_t = jnp.pad(wg_t, ((0, 0), (0, Ip - I)))
        wu_t = jnp.pad(wu_t, ((0, 0), (0, Ip - I)))
        wd_t = jnp.pad(wd_t, ((0, Ip - I), (0, 0)))

    # Fuse gate and up weights so grid step j streams one [H, 2*ti] tile laid
    # out as [ gate[:, j*ti:(j+1)*ti] | up[:, j*ti:(j+1)*ti] ].
    nI = Ip // ti
    wgu = jnp.concatenate(
        [wg_t.reshape(H, nI, ti), wu_t.reshape(H, nI, ti)], axis=-1
    ).reshape(H, 2 * Ip)

    grid = (Mp // tm, Ip // ti)

    if jnp.dtype(x.dtype) == jnp.dtype(jnp.float32):
        kernel = mlp_kernel_f32_out
        scratch_shapes = []
    else:
        kernel = mlp_kernel_acc
        scratch_shapes = [pltpu.VMEM((tm, H), jnp.float32)]

    out2 = pl.pallas_call(
        kernel,
        out_shape=jax.ShapeDtypeStruct((Mp, H), x.dtype),
        grid_spec=pltpu.PrefetchScalarGridSpec(
            num_scalar_prefetch=0,
            grid=grid,
            in_specs=[
                pl.BlockSpec((tm, H), lambda i, j: (i, 0)),      # x rows
                pl.BlockSpec((H, 2 * ti), lambda i, j: (0, j)),  # fused gate|up
                pl.BlockSpec((ti, H), lambda i, j: (j, 0)),      # down_proj.T
            ],
            out_specs=pl.BlockSpec((tm, H), lambda i, j: (i, 0)),
            scratch_shapes=scratch_shapes,
        ),
        compiler_params=pltpu.CompilerParams(
            dimension_semantics=("parallel", "arbitrary"),
            vmem_limit_bytes=vmem_limit_bytes,
        ),
    )(x2, wgu, wd_t)

    return out2[:M].reshape(B, S, H)


def mlp_reference(x, wg_t, wu_t, wd_t):
    g = jnp.dot(x, wg_t)
    u = jnp.dot(x, wu_t)
    return jnp.dot((g * jax.nn.sigmoid(g)) * u, wd_t)


if __name__ == "__main__":
    # Small, TPU-tile-friendly shapes consistent with the module.
    batch, seq = 2, 8
    hidden_size = 128
    intermediate_size = 256
    # hidden_act = "silu" (Baichuan2 config default)

    key = jax.random.PRNGKey(0)
    kx, kg, ku, kd = jax.random.split(key, 4)

    x = jax.random.normal(kx, (batch, seq, hidden_size), dtype=jnp.float32)
    scale_h = 1.0 / (hidden_size ** 0.5)
    scale_i = 1.0 / (intermediate_size ** 0.5)
    wg_t = jax.random.normal(kg, (hidden_size, intermediate_size), jnp.float32) * scale_h
    wu_t = jax.random.normal(ku, (hidden_size, intermediate_size), jnp.float32) * scale_h
    wd_t = jax.random.normal(kd, (intermediate_size, hidden_size), jnp.float32) * scale_i

    # 1) f32 path (accumulates directly in the resident output block).
    out = jax.block_until_ready(mlp_pallas(x, wg_t, wu_t, wd_t))
    ref = mlp_reference(x, wg_t, wu_t, wd_t)
    assert out.shape == (batch, seq, hidden_size)
    assert jnp.allclose(out, ref, atol=1e-4, rtol=1e-4), "f32 mismatch vs reference"

    # 2) Non-divisible M and I exercise the padding path.
    x_odd = jax.random.normal(kx, (3, 5, hidden_size), dtype=jnp.float32)
    wg_odd, wu_odd, wd_odd = wg_t[:, :192], wu_t[:, :192], wd_t[:192]
    out_odd = jax.block_until_ready(mlp_pallas(x_odd, wg_odd, wu_odd, wd_odd))
    ref_odd = mlp_reference(x_odd, wg_odd, wu_odd, wd_odd)
    assert out_odd.shape == (3, 5, hidden_size)
    assert jnp.allclose(out_odd, ref_odd, atol=1e-4, rtol=1e-4), "padded mismatch"

    # 3) bf16 weights/activations path (f32 accumulation inside the kernel).
    xb, wgb, wub, wdb = (a.astype(jnp.bfloat16) for a in (x, wg_t, wu_t, wd_t))
    out_bf = jax.block_until_ready(mlp_pallas(xb, wgb, wub, wdb))
    ref_bf = mlp_reference(
        xb.astype(jnp.float32), wgb.astype(jnp.float32),
        wub.astype(jnp.float32), wdb.astype(jnp.float32),
    )
    assert jnp.allclose(out_bf.astype(jnp.float32), ref_bf, atol=5e-2, rtol=5e-2), \
        "bf16 mismatch vs reference"

    print("KERNEL_OK")
</pallas_src>

<mosaic_0001>
module attributes {stable_mosaic.version = 11 : i64} {
  func.func @mlp_kernel_f32_out(%arg0: i32, %arg1: i32, %arg2: memref<8x128xf32, #tpu.memory_space<vmem>>, %arg3: memref<128x512xf32, #tpu.memory_space<vmem>>, %arg4: memref<256x128xf32, #tpu.memory_space<vmem>>, %arg5: memref<8x128xf32, #tpu.memory_space<vmem>>) attributes {dimension_semantics = [#tpu.dimension_semantics<parallel>, #tpu.dimension_semantics<arbitrary>], iteration_bounds = array<i64: 2, 1>, scalar_prefetch = 0 : i64, scratch_operands = 0 : i64, tpu.core_type = #tpu.core_type<tc>, window_params = [{transform_indices = @transform_0, window_bounds = array<i64: 8, 128>}, {transform_indices = @transform_1, window_bounds = array<i64: 128, 512>}, {transform_indices = @transform_2, window_bounds = array<i64: 256, 128>}, {transform_indices = @transform_3, window_bounds = array<i64: 8, 128>}]} {
    %c0_i32 = arith.constant 0 : i32
    %0 = arith.cmpi eq, %arg1, %c0_i32 : i32
    %1 = arith.extui %0 : i1 to i32
    %c0_i32_0 = arith.constant 0 : i32
    %2 = arith.cmpi ne, %1, %c0_i32_0 : i32
    scf.if %2 {
      %cst_12 = arith.constant 0.000000e+00 : f32
      %20 = vector.broadcast %cst_12 : f32 to vector<8x128xf32>
      %c0_13 = arith.constant 0 : index
      %c0_14 = arith.constant 0 : index
      %21 = vector.load %arg5[%c0_13, %c0_14] : memref<8x128xf32, #tpu.memory_space<vmem>>, vector<8x128xf32>
      tpu.vector_store %arg5[%c0_13, %c0_14], %20 {strides = array<i32>} : memref<8x128xf32, #tpu.memory_space<vmem>>, vector<8x128xf32>,
    } else {
    }
    %c0 = arith.constant 0 : index
    %c0_1 = arith.constant 0 : index
    %3 = vector.load %arg2[%c0, %c0_1] : memref<8x128xf32, #tpu.memory_space<vmem>>, vector<8x128xf32>
    %c0_2 = arith.constant 0 : index
    %c0_3 = arith.constant 0 : index
    %4 = vector.load %arg3[%c0_2, %c0_3] : memref<128x512xf32, #tpu.memory_space<vmem>>, vector<128x512xf32>
    %cst = arith.constant dense<0.000000e+00> : vector<8x512xf32>
    %5 = tpu.matmul %3, %4, %cst {dimension_numbers = #tpu.dot_dimension_numbers<[1], [0], [0], [1], [0, 0, 1, 1], [], []>} : vector<8x128xf32>, vector<128x512xf32>, vector<8x512xf32> -> vector<8x512xf32>
    %6 = vector.extract_strided_slice %5 {offsets = [0, 0], sizes = [8, 256], strides = [1, 1]} : vector<8x512xf32> to vector<8x256xf32>
    %7 = vector.extract_strided_slice %5 {offsets = [0, 256], sizes = [8, 256], strides = [1, 1]} : vector<8x512xf32> to vector<8x256xf32>
    %8 = arith.negf %6 : vector<8x256xf32>
    %9 = math.exp %8 : vector<8x256xf32>
    %cst_4 = arith.constant 1.000000e+00 : f32
    %10 = vector.broadcast %cst_4 : f32 to vector<8x256xf32>
    %11 = arith.addf %10, %9 : vector<8x256xf32>
    %12 = arith.divf %10, %11 : vector<8x256xf32>
    %13 = arith.mulf %6, %12 : vector<8x256xf32>
    %14 = arith.mulf %13, %7 : vector<8x256xf32>
    %c0_5 = arith.constant 0 : index
    %c0_6 = arith.constant 0 : index
    %15 = vector.load %arg5[%c0_5, %c0_6] : memref<8x128xf32, #tpu.memory_space<vmem>>, vector<8x128xf32>
    %c0_7 = arith.constant 0 : index
    %c0_8 = arith.constant 0 : index
    %16 = vector.load %arg4[%c0_7, %c0_8] : memref<256x128xf32, #tpu.memory_space<vmem>>, vector<256x128xf32>
    %cst_9 = arith.constant dense<0.000000e+00> : vector<8x128xf32>
    %17 = tpu.matmul %14, %16, %cst_9 {dimension_numbers = #tpu.dot_dimension_numbers<[1], [0], [0], [1], [0, 0, 1, 1], [], []>} : vector<8x256xf32>, vector<256x128xf32>, vector<8x128xf32> -> vector<8x128xf32>
    %18 = arith.addf %15, %17 : vector<8x128xf32>
    %c0_10 = arith.constant 0 : index
    %c0_11 = arith.constant 0 : index
    %19 = vector.load %arg5[%c0_10, %c0_11] : memref<8x128xf32, #tpu.memory_space<vmem>>, vector<8x128xf32>
    tpu.vector_store %arg5[%c0_10, %c0_11], %18 {strides = array<i32>} : memref<8x128xf32, #tpu.memory_space<vmem>>, vector<8x128xf32>,
    return
  }
  func.func @transform_0(%arg0: i32, %arg1: i32) -> (i32, i32) {
    %c0_i32 = arith.constant 0 : i32
    %c0_i32_0 = arith.constant 0 : i32
    return %arg0, %c0_i32 : i32, i32
  }
  func.func @transform_1(%arg0: i32, %arg1: i32) -> (i32, i32) {
    %c0_i32 = arith.constant 0 : i32
    %c0_i32_0 = arith.constant 0 : i32
    return %c0_i32, %arg1 : i32, i32
  }
  func.func @transform_2(%arg0: i32, %arg1: i32) -> (i32, i32) {
    %c0_i32 = arith.constant 0 : i32
    %c0_i32_0 = arith.constant 0 : i32
    return %arg1, %c0_i32 : i32, i32
  }
  func.func @transform_3(%arg0: i32, %arg1: i32) -> (i32, i32) {
    %c0_i32 = arith.constant 0 : i32
    %c0_i32_0 = arith.constant 0 : i32
    return %arg0, %c0_i32 : i32, i32
  }
}

</mosaic_0001>

<llo_original>
// kernel: mlp_pallas.1
$region0: #{mlp_pallas.1}
  #allocation0 [shape = 'u32[]', space=smem, size = 0x4, offset = 0x4, fixed_abs, tag = 'smem constant byte address 0x4 - core index']
  #allocation1 [shape = 'u32[144,128]{1,0:T(1,128)}', space=vmem, size = 0x12000, scoped, tag = 'internal scratch']
  %s0 = inlined_call_operand.vmem [shape: f32[16,128], index: 0, kind: input, shape index: {}]
  %s1 = inlined_call_operand.vmem [shape: f32[128,512], index: 1, kind: input, shape index: {}]
  %s2 = inlined_call_operand.vmem [shape: f32[256,128], index: 2, kind: input, shape index: {}]
  %s3 = inlined_call_operand.hbm [shape: f32[16,128], index: 3, kind: output, shape index: {}]
  %s4 = sld [smem:[#allocation0]]
  $region49: #{mlp_pallas.1} parent=0
    _
  %s6 = ssub.s32 1, %s4
  %s7 = scalar_select 0, %s6, %s4
  $region1: #{mlp_pallas.1} parent=0
    #allocation2 [shape = 'u8[8192]{0}', space=vmem, size = 0x2000, scoped, tag = 'output window, operand 0']
    #allocation3 [shape = 's32[2]{0}', space=sflag, size = 0x8, scoped, tag = 'scoped memory for mlp_pallas.1']
    %8 = vsyncpa [#allocation3], 0
    %s9 = scalar_lea.sflag [#allocation3], 1
    %10 = vsyncpa %s9, 0
    loop: start=0, step=1, limit=4
    $region2: #{mlp_pallas.1} parent=1 // loop_pre_header
      _
    $region3: #{mlp_pallas.1} parent=1 // loop_header
      %s12 = sphi 0, %s16
      %p13 = scmp.ge.s32.totalorder %s12, 4
      %s19 = sphi 0, %s31
      %s20 = sphi 0, %s27
      %s21 = sphi 0, %s19
      %s22 = sphi 0, %s20
      %s23 = sphi 0, %s21
      %s24 = sphi 0, %s22
      %s34 = sphi 0, %s36
      %s37 = sphi 0, %s34
      %s38 = sphi 0, %s37
      %s54 = sphi 0, %s38
      %s60 = sphi 0, %s62
      %s63 = sphi 0, %s60
      %s64 = sphi 0, %s63
      %s80 = sphi 0, %s64
      %s86 = sphi 0, %s88
      %s89 = sphi 0, %s86
      %s90 = sphi 0, %s89
      %s106 = sphi 0, %s90
      %s112 = sphi 0, %s114
      %s115 = sphi 0, %s112
      %s116 = sphi 0, %s115
      %s132 = sphi 0, %s116
    $region4: #{mlp_pallas.1} parent=1 // loop_header_branch
      %15 = sbr.rel (%p13) target = $region8
    $region5: #{mlp_pallas.1} parent=1 // loop_body
      %s17 = ssub.s32 %s12, 1
      %s18 = ssub.s32 %s12, 2
      %s25 = sadd.s32 1, %s20
      %p26 = scmp.ge.s32.totalorder %s25, 1
      %s27 = scalar_select %p26, 0, %s25
      %s28 = sadd.s32 1, %s19
      %s29 = scalar_select %p26, %s28, %s19
      %p30 = scmp.ge.s32.totalorder %s29, 2
      %s31 = scalar_select %p30, 0, %s29
      %s32 = ssub.s32 %s19, %s31
      %p33 = scmp.eq.s32.totalorder %s32, 0
      %s35 = sadd.s32 %s34, 1
      %s36 = scalar_select %p33, %s34, %s35
      %p39 = pneg %p33
      %p40 = scmp.eq.s32.totalorder %s12, 1
      %p41 = por %p39, %p40
      %p42 = scmp.ne.s32.totalorder %s34, %s37
      %p43 = scmp.eq.s32.totalorder %s12, 0
      %p44 = por %p42, %p43
      %p45 = scmp.ne.s32.totalorder %s34, %s37
      %p46 = scmp.eq.s32.totalorder %s17, 1
      %p47 = por %p45, %p46
      %p48 = scmp.ne.s32.totalorder %s37, %s38
      %p49 = scmp.eq.s32.totalorder %s17, 0
      %p50 = por %p48, %p49
      %p51 = scmp.ne.s32.totalorder %s37, %s38
      %p52 = scmp.eq.s32.totalorder %s18, 1
      %p53 = por %p51, %p52
      %p55 = scmp.ne.s32.totalorder %s38, %s54
      %p56 = scmp.eq.s32.totalorder %s18, 0
      %p57 = por %p55, %p56
      %s58 = ssub.s32 %s20, %s27
      %p59 = scmp.eq.s32.totalorder %s58, 0
      %s61 = sadd.s32 %s60, 1
      %s62 = scalar_select %p59, %s60, %s61
      %p65 = pneg %p59
      %p66 = scmp.eq.s32.totalorder %s12, 1
      %p67 = por %p65, %p66
      %p68 = scmp.ne.s32.totalorder %s60, %s63
      %p69 = scmp.eq.s32.totalorder %s12, 0
      %p70 = por %p68, %p69
      %p71 = scmp.ne.s32.totalorder %s60, %s63
      %p72 = scmp.eq.s32.totalorder %s17, 1
      %p73 = por %p71, %p72
      %p74 = scmp.ne.s32.totalorder %s63, %s64
      %p75 = scmp.eq.s32.totalorder %s17, 0
      %p76 = por %p74, %p75
      %p77 = scmp.ne.s32.totalorder %s63, %s64
      %p78 = scmp.eq.s32.totalorder %s18, 1
      %p79 = por %p77, %p78
      %p81 = scmp.ne.s32.totalorder %s64, %s80
      %p82 = scmp.eq.s32.totalorder %s18, 0
      %p83 = por %p81, %p82
      %s84 = ssub.s32 %s20, %s27
      %p85 = scmp.eq.s32.totalorder %s84, 0
      %s87 = sadd.s32 %s86, 1
      %s88 = scalar_select %p85, %s86, %s87
      %p91 = pneg %p85
      %p92 = scmp.eq.s32.totalorder %s12, 1
      %p93 = por %p91, %p92
      %p94 = scmp.ne.s32.totalorder %s86, %s89
      %p95 = scmp.eq.s32.totalorder %s12, 0
      %p96 = por %p94, %p95
      %p97 = scmp.ne.s32.totalorder %s86, %s89
      %p98 = scmp.eq.s32.totalorder %s17, 1
      %p99 = por %p97, %p98
      %p100 = scmp.ne.s32.totalorder %s89, %s90
      %p101 = scmp.eq.s32.totalorder %s17, 0
      %p102 = por %p100, %p101
      %p103 = scmp.ne.s32.totalorder %s89, %s90
      %p104 = scmp.eq.s32.totalorder %s18, 1
      %p105 = por %p103, %p104
      %p107 = scmp.ne.s32.totalorder %s90, %s106
      %p108 = scmp.eq.s32.totalorder %s18, 0
      %p109 = por %p107, %p108
      %s110 = ssub.s32 %s19, %s31
      %p111 = scmp.eq.s32.totalorder %s110, 0
      %s113 = sadd.s32 %s112, 1
      %s114 = scalar_select %p111, %s112, %s113
      %p117 = pneg %p111
      %p118 = scmp.eq.s32.totalorder %s12, 1
      %p119 = por %p117, %p118
      %p120 = scmp.ne.s32.totalorder %s112, %s115
      %p121 = scmp.eq.s32.totalorder %s12, 0
      %p122 = por %p120, %p121
      %p123 = scmp.ne.s32.totalorder %s112, %s115
      %p124 = scmp.eq.s32.totalorder %s17, 1
      %p125 = por %p123, %p124
      %p126 = scmp.ne.s32.totalorder %s115, %s116
      %p127 = scmp.eq.s32.totalorder %s17, 0
      %p128 = por %p126, %p127
      %p129 = scmp.ne.s32.totalorder %s115, %s116
      %p130 = scmp.eq.s32.totalorder %s18, 1
      %p131 = por %p129, %p130
      %p133 = scmp.ne.s32.totalorder %s116, %s132
      %p134 = scmp.eq.s32.totalorder %s18, 0
      %p135 = por %p133, %p134
      %p136 = scmp.le.s32.totalorder 1, %s12
      %p137 = scmp.lt.s32.totalorder %s12, 3
      %p138 = pnand %p136, %p137
      %p139 = pneg %p138
      // Predicated region
      $region9: #{mlp_pallas.1} parent=5 // pred_check
        _
      $region10: #{mlp_pallas.1} parent=5 // pred_check_branch
        %141 = sbr.rel (%p138) target = $region12
      $region11: #{mlp_pallas.1} parent=5 // pred_region
        %s142 = ssub.s32 %s12, 1
        // Predicated region
        $region13: #{mlp_pallas.1} parent=11 // pred_check
          %p143 = pneg %p76
        $region14: #{mlp_pallas.1} parent=11 // pred_check_branch
          %145 = sbr.rel (%p143) target = $region16
        $region15: #{mlp_pallas.1} parent=11 // pred_region
          %s146 = smul.u32 4, %s22
          %p147 = scmp.lt.s32.totalorder %s146, 3
          %s148 = scalar_select %p147, %s146, 3
          %s149 = smul.addr %s148, 8
          %s150 = scalar_lea.vmem %s1, %s149
          %s151 = smul.u32 4, %s22
        $region16: #{mlp_pallas.1} parent=11 // pred_fallthru
          _
        // Predicated region
        $region17: #{mlp_pallas.1} parent=11 // pred_check
          %p152 = pneg %p102
        $region18: #{mlp_pallas.1} parent=11 // pred_check_branch
          %154 = sbr.rel (%p152) target = $region20
        $region19: #{mlp_pallas.1} parent=11 // pred_region
          %s155 = smul.u32 32, %s22
          %p156 = scmp.lt.s32.totalorder %s155, 31
          %s157 = scalar_select %p156, %s155, 31
          %s158 = smul.addr %s157, 8
          %s159 = scalar_lea.vmem %s2, %s158
          %s160 = smul.u32 32, %s22
        $region20: #{mlp_pallas.1} parent=11 // pred_fallthru
          _
      $region12: #{mlp_pallas.1} parent=5 // pred_fallthru
        _
      %p161 = scmp.lt.s32.totalorder %s12, 2
      // Predicated region
      $region21: #{mlp_pallas.1} parent=5 // pred_check
        %p162 = pneg %p161
      $region22: #{mlp_pallas.1} parent=5 // pred_check_branch
        %164 = sbr.rel (%p162) target = $region24
      $region23: #{mlp_pallas.1} parent=5 // pred_region
        // Predicated region
        $region25: #{mlp_pallas.1} parent=23 // pred_check
          %p165 = pneg %p44
        $region26: #{mlp_pallas.1} parent=23 // pred_check_branch
          %167 = sbr.rel (%p165) target = $region28
        $region27: #{mlp_pallas.1} parent=23 // pred_region
          %p168 = scmp.lt.s32.totalorder %s19, 1
          %s169 = scalar_select %p168, %s19, 1
          %s170 = smul.addr %s169, 8
          %s171 = scalar_lea.vmem %s0, %s170
        $region28: #{mlp_pallas.1} parent=23 // pred_fallthru
          _
      $region24: #{mlp_pallas.1} parent=5 // pred_fallthru
        _
      %p172 = scmp.le.s32.totalorder 1, %s12
      %p173 = scmp.lt.s32.totalorder %s12, 3
      %p174 = pnand %p172, %p173
      %p175 = pneg %p174
      // Predicated region
      $region29: #{mlp_pallas.1} parent=5 // pred_check
        _
      $region30: #{mlp_pallas.1} parent=5 // pred_check_branch
        %177 = sbr.rel (%p174) target = $region32
      $region31: #{mlp_pallas.1} parent=5 // pred_region
        %s178 = ssub.s32 %s12, 1
        %p179 = scmp.lt.s32.totalorder %s21, 1
        %s180 = scalar_select %p179, %s21, 1
        %s181 = smul.addr %s180, 8
        %s182 = scalar_lea.vmem %s0, %s181
        %p183 = pneg %p50
        %p184 = pneg %p47
        %s185 = smul.u32 4, %s22
        %p186 = scmp.lt.s32.totalorder %s185, 3
        %s187 = scalar_select %p186, %s185, 3
        %s188 = smul.addr %s187, 8
        %s189 = scalar_lea.vmem %s1, %s188
        %p190 = pneg %p76
        %p191 = pneg %p73
        %s192 = smul.u32 32, %s22
        %p193 = scmp.lt.s32.totalorder %s192, 31
        %s194 = scalar_select %p193, %s192, 31
        %s195 = smul.addr %s194, 8
        %s196 = scalar_lea.vmem %s2, %s195
        %p197 = pneg %p102
        %p198 = pneg %p99
        %p199 = pneg %p128
        %p200 = pneg %p125
        %s201 = sand.u32 %s115, 1
        %s202 = scalar_lea.sflag [#allocation3], %s201
        %s203 = sand.u32 %s115, 1
        %s204 = smul.addr %s203, 8
        %s205 = scalar_lea.vmem [#allocation2], %s204
        %p206 = scmp.lt.s32.totalorder %s21, 1
        %s207 = scalar_select %p206, %s21, 1
        %s208 = smul.addr %s207, 8
        %s209 = scalar_lea.vmem %s0, %s208
        %s210 = smul.u32 4, %s22
        %p211 = scmp.lt.s32.totalorder %s210, 3
        %s212 = scalar_select %p211, %s210, 3
        %s213 = smul.addr %s212, 8
        %s214 = scalar_lea.vmem %s1, %s213
        %s215 = smul.u32 4, %s22
        %s216 = smul.u32 32, %s22
        %p217 = scmp.lt.s32.totalorder %s216, 31
        %s218 = scalar_select %p217, %s216, 31
        %s219 = smul.addr %s218, 8
        %s220 = scalar_lea.vmem %s2, %s219
        %s221 = smul.u32 32, %s22
        %p222 = scmp.eq.s32.totalorder %s22, 0
        // Predicated region
        $region33: #{mlp_pallas.1} parent=31 // pred_check
          %p223 = pneg %p222
        $region34: #{mlp_pallas.1} parent=31 // pred_check_branch
          %225 = sbr.rel (%p223) target = $region36
        $region35: #{mlp_pallas.1} parent=31 // pred_region
          %226 = vst [vmem:[%s205] sm:$0xff] 0.0
        $region36: #{mlp_pallas.1} parent=31 // pred_fallthru
          _
        %v227 = vld [vmem:[%s209] sm:$0xff]
        %v228 = vld [vmem:[%s214] sm:$0xff]
        %v229 = vld [vmem:[%s214 + $0x8] sm:$0xff]
        %v230 = vld [vmem:[%s214 + $0x10] sm:$0xff]
        %v231 = vld [vmem:[%s214 + $0x18] sm:$0xff]
        %v232 = vld [vmem:[%s214 + $0x20] sm:$0xff]
        %v233 = vld [vmem:[%s214 + $0x28] sm:$0xff]
        %v234 = vld [vmem:[%s214 + $0x30] sm:$0xff]
        %v235 = vld [vmem:[%s214 + $0x38] sm:$0xff]
        %v236 = vld [vmem:[%s214 + $0x40] sm:$0xff]
        %v237 = vld [vmem:[%s214 + $0x48] sm:$0xff]
        %v238 = vld [vmem:[%s214 + $0x50] sm:$0xff]
        %v239 = vld [vmem:[%s214 + $0x58] sm:$0xff]
        %v240 = vld [vmem:[%s214 + $0x60] sm:$0xff]
        %v241 = vld [vmem:[%s214 + $0x68] sm:$0xff]
        %v242 = vld [vmem:[%s214 + $0x70] sm:$0xff]
        %v243 = vld [vmem:[%s214 + $0x78] sm:$0xff]
        %v244 = vld [vmem:[%s214 + $0x80] sm:$0xff]
        %v245 = vld [vmem:[%s214 + $0x88] sm:$0xff]
        %v246 = vld [vmem:[%s214 + $0x90] sm:$0xff]
        %v247 = vld [vmem:[%s214 + $0x98] sm:$0xff]
        %v248 = vld [vmem:[%s214 + $0xa0] sm:$0xff]
        %v249 = vld [vmem:[%s214 + $0xa8] sm:$0xff]
        %v250 = vld [vmem:[%s214 + $0xb0] sm:$0xff]
        %v251 = vld [vmem:[%s214 + $0xb8] sm:$0xff]
        %v252 = vld [vmem:[%s214 + $0xc0] sm:$0xff]
        %v253 = vld [vmem:[%s214 + $0xc8] sm:$0xff]
        %v254 = vld [vmem:[%s214 + $0xd0] sm:$0xff]
        %v255 = vld [vmem:[%s214 + $0xd8] sm:$0xff]
        %v256 = vld [vmem:[%s214 + $0xe0] sm:$0xff]
        %v257 = vld [vmem:[%s214 + $0xe8] sm:$0xff]
        %v258 = vld [vmem:[%s214 + $0xf0] sm:$0xff]
        %v259 = vld [vmem:[%s214 + $0xf8] sm:$0xff]
        %v260 = vld [vmem:[%s214 + $0x100] sm:$0xff]
        %v261 = vld [vmem:[%s214 + $0x108] sm:$0xff]
        %v262 = vld [vmem:[%s214 + $0x110] sm:$0xff]
        %v263 = vld [vmem:[%s214 + $0x118] sm:$0xff]
        %v264 = vld [vmem:[%s214 + $0x120] sm:$0xff]
        %v265 = vld [vmem:[%s214 + $0x128] sm:$0xff]
        %v266 = vld [vmem:[%s214 + $0x130] sm:$0xff]
        %v267 = vld [vmem:[%s214 + $0x138] sm:$0xff]
        %v268 = vld [vmem:[%s214 + $0x140] sm:$0xff]
        %v269 = vld [vmem:[%s214 + $0x148] sm:$0xff]
        %v270 = vld [vmem:[%s214 + $0x150] sm:$0xff]
        %v271 = vld [vmem:[%s214 + $0x158] sm:$0xff]
        %v272 = vld [vmem:[%s214 + $0x160] sm:$0xff]
        %v273 = vld [vmem:[%s214 + $0x168] sm:$0xff]
        %v274 = vld [vmem:[%s214 + $0x170] sm:$0xff]
        %v275 = vld [vmem:[%s214 + $0x178] sm:$0xff]
        %v276 = vld [vmem:[%s214 + $0x180] sm:$0xff]
        %v277 = vld [vmem:[%s214 + $0x188] sm:$0xff]
        %v278 = vld [vmem:[%s214 + $0x190] sm:$0xff]
        %v279 = vld [vmem:[%s214 + $0x198] sm:$0xff]
        %v280 = vld [vmem:[%s214 + $0x1a0] sm:$0xff]
        %v281 = vld [vmem:[%s214 + $0x1a8] sm:$0xff]
        %v282 = vld [vmem:[%s214 + $0x1b0] sm:$0xff]
        %v283 = vld [vmem:[%s214 + $0x1b8] sm:$0xff]
        %v284 = vld [vmem:[%s214 + $0x1c0] sm:$0xff]
        %v285 = vld [vmem:[%s214 + $0x1c8] sm:$0xff]
        %v286 = vld [vmem:[%s214 + $0x1d0] sm:$0xff]
        %v287 = vld [vmem:[%s214 + $0x1d8] sm:$0xff]
        %v288 = vld [vmem:[%s214 + $0x1e0] sm:$0xff]
        %v289 = vld [vmem:[%s214 + $0x1e8] sm:$0xff]
        %v290 = vld [vmem:[%s214 + $0x1f0] sm:$0xff]
        %v291 = vld [vmem:[%s214 + $0x1f8] sm:$0xff]
        %292 = vmatprep.subr.mxu0 %v289
        %293 = vmatpush1.msra.mxu0 %v288
        %294 = vmatprep.subr.mxu0 %v285
        %295 = vmatpush1.msra.mxu0 %v284
        %296 = vmatprep.subr.mxu0 %v281
        %297 = vmatpush1.msra.mxu0 %v280
        %298 = vmatprep.subr.mxu0 %v277
        %299 = vmatpush1.msra.mxu0 %v276
        %300 = vmatprep.subr.mxu0 %v273
        %301 = vmatpush1.msra.mxu0 %v272
        %302 = vmatprep.subr.mxu0 %v269
        %303 = vmatpush1.msra.mxu0 %v268
        %304 = vmatprep.subr.mxu0 %v265
        %305 = vmatpush1.msra.mxu0 %v264
        %306 = vmatprep.subr.mxu0 %v261
        %307 = vmatpush1.msra.mxu0 %v260
        %308 = vmatprep.subr.mxu0 %v257
        %309 = vmatpush1.msra.mxu0 %v256
        %310 = vmatprep.subr.mxu0 %v253
        %311 = vmatpush1.msra.mxu0 %v252
        %312 = vmatprep.subr.mxu0 %v249
        %313 = vmatpush1.msra.mxu0 %v248
        %314 = vmatprep.subr.mxu0 %v245
        %315 = vmatpush1.msra.mxu0 %v244
        %316 = vmatprep.subr.mxu0 %v241
        %317 = vmatpush1.msra.mxu0 %v240
        %318 = vmatprep.subr.mxu0 %v237
        %319 = vmatpush1.msra.mxu0 %v236
        %320 = vmatprep.subr.mxu0 %v233
        %321 = vmatpush1.msra.mxu0 %v232
        %322 = vmatprep.subr.mxu0 %v229
        %323 = vmatpush1.msra.mxu0 %v228
        %324 = vmatprep.subr.mxu0 0.0
        %325 = vmatpush2.msra.mxu0 0.0
        %326 = vmatprep.subr.mxu0 0.0
        %327 = vmatpush2.msra.mxu0 0.0
        %328 = vmatprep.subr.mxu0 0.0
        %329 = vmatpush2.msra.mxu0 0.0
        %330 = vmatprep.subr.mxu0 0.0
        %331 = vmatpush2.msra.mxu0 0.0
        %332 = vmatprep.subr.mxu0 0.0
        %333 = vmatpush2.msra.mxu0 0.0
        %334 = vmatprep.subr.mxu0 0.0
        %335 = vmatpush2.msra.mxu0 0.0
        %336 = vmatprep.subr.mxu0 0.0
        %337 = vmatpush2.msra.mxu0 0.0
        %338 = vmatprep.subr.mxu0 0.0
        %339 = vmatpush2.msra.mxu0 0.0
        %340 = vmatprep.subr.mxu0 0.0
        %341 = vmatpush2.msra.mxu0 0.0
        %342 = vmatprep.subr.mxu0 0.0
        %343 = vmatpush2.msra.mxu0 0.0
        %344 = vmatprep.subr.mxu0 0.0
        %345 = vmatpush2.msra.mxu0 0.0
        %346 = vmatprep.subr.mxu0 0.0
        %347 = vmatpush2.msra.mxu0 0.0
        %348 = vmatprep.subr.mxu0 0.0
        %349 = vmatpush2.msra.mxu0 0.0
        %350 = vmatprep.subr.mxu0 0.0
        %351 = vmatpush2.msra.mxu0 0.0
        %352 = vmatprep.subr.mxu0 0.0
        %353 = vmatpush2.msra.mxu0 0.0
        %354 = vmatprep.subr.mxu0 0.0
        %355 = vmatpush2.msra.mxu0 0.0
        %356 = vmatprep.mubr.f32.mxu0 0.0
        %357 = vmatmul.mubr.f32.gmra.mxu0 %v227
        %v358 = vpop.f32.mrf.mxu0
        %v359 = vadd.f32 0.0, %v358
        %v360 = vpop.f32.mrf.mxu0
        %v361 = vadd.f32 0.0, %v360
        %362 = vdwg.mxu0
        %363 = vmatprep.subr.mxu0 %v291
        %364 = vmatpush1.msra.mxu0 %v290
        %365 = vmatprep.subr.mxu0 %v287
        %366 = vmatpush1.msra.mxu0 %v286
        %367 = vmatprep.subr.mxu0 %v283
        %368 = vmatpush1.msra.mxu0 %v282
        %369 = vmatprep.subr.mxu0 %v279
        %370 = vmatpush1.msra.mxu0 %v278
        %371 = vmatprep.subr.mxu0 %v275
        %372 = vmatpush1.msra.mxu0 %v274
        %373 = vmatprep.subr.mxu0 %v271
        %374 = vmatpush1.msra.mxu0 %v270
        %375 = vmatprep.subr.mxu0 %v267
        %376 = vmatpush1.msra.mxu0 %v266
        %377 = vmatprep.subr.mxu0 %v263
        %378 = vmatpush1.msra.mxu0 %v262
        %379 = vmatprep.subr.mxu0 %v259
        %380 = vmatpush1.msra.mxu0 %v258
        %381 = vmatprep.subr.mxu0 %v255
        %382 = vmatpush1.msra.mxu0 %v254
        %383 = vmatprep.subr.mxu0 %v251
        %384 = vmatpush1.msra.mxu0 %v250
        %385 = vmatprep.subr.mxu0 %v247
        %386 = vmatpush1.msra.mxu0 %v246
        %387 = vmatprep.subr.mxu0 %v243
        %388 = vmatpush1.msra.mxu0 %v242
        %389 = vmatprep.subr.mxu0 %v239
        %390 = vmatpush1.msra.mxu0 %v238
        %391 = vmatprep.subr.mxu0 %v235
        %392 = vmatpush1.msra.mxu0 %v234
        %393 = vmatprep.subr.mxu0 %v231
        %394 = vmatpush1.msra.mxu0 %v230
        %395 = vmatprep.subr.mxu0 0.0
        %396 = vmatpush2.msra.mxu0 0.0
        %397 = vmatprep.subr.mxu0 0.0
        %398 = vmatpush2.msra.mxu0 0.0
        %399 = vmatprep.subr.mxu0 0.0
        %400 = vmatpush2.msra.mxu0 0.0
        %401 = vmatprep.subr.mxu0 0.0
        %402 = vmatpush2.msra.mxu0 0.0
        %403 = vmatprep.subr.mxu0 0.0
        %404 = vmatpush2.msra.mxu0 0.0
        %405 = vmatprep.subr.mxu0 0.0
        %406 = vmatpush2.msra.mxu0 0.0
        %407 = vmatprep.subr.mxu0 0.0
        %408 = vmatpush2.msra.mxu0 0.0
        %409 = vmatprep.subr.mxu0 0.0
        %410 = vmatpush2.msra.mxu0 0.0
        %411 = vmatprep.subr.mxu0 0.0
        %412 = vmatpush2.msra.mxu0 0.0
        %413 = vmatprep.subr.mxu0 0.0
        %414 = vmatpush2.msra.mxu0 0.0
        %415 = vmatprep.subr.mxu0 0.0
        %416 = vmatpush2.msra.mxu0 0.0
        %417 = vmatprep.subr.mxu0 0.0
        %418 = vmatpush2.msra.mxu0 0.0
        %419 = vmatprep.subr.mxu0 0.0
        %420 = vmatpush2.msra.mxu0 0.0
        %421 = vmatprep.subr.mxu0 0.0
        %422 = vmatpush2.msra.mxu0 0.0
        %423 = vmatprep.subr.mxu0 0.0
        %424 = vmatpush2.msra.mxu0 0.0
        %425 = vmatprep.subr.mxu0 0.0
        %426 = vmatpush2.msra.mxu0 0.0
        %427 = vmatprep.mubr.f32.mxu0 0.0
        %428 = vmatmul.mubr.f32.gmra.mxu0 %v227
        %v429 = vpop.f32.mrf.mxu0
        %v430 = vadd.f32 0.0, %v429
        %v431 = vpop.f32.mrf.mxu0
        %v432 = vadd.f32 0.0, %v431
        %433 = vdwg.mxu0
        %v434 = vxor.u32 %v359, 2147483648
        %v435 = vxor.u32 %v361, 2147483648
        %v436 = vmul.f32 %v434, 1.442695
        %v437 = vpow.pop %v436
        %v438 = vmul.f32 %v435, 1.442695
        %v439 = vpow.pop %v438
        %v440 = vadd.f32 %v437, 1.0
        %v441 = vadd.f32 %v439, 1.0
        %v442 = vrcp.pop %v440
        %v443 = vmul.f32 1.0, %v442
        %v444 = vrcp.pop %v441
        %v445 = vmul.f32 1.0, %v444
        %v446 = vmul.f32 %v359, %v443
        %v447 = vmul.f32 %v361, %v445
        %v448 = vmul.f32 %v446, %v430
        %v449 = vmul.f32 %v447, %v432
        %v450 = vld [vmem:[%s205] sm:$0xff]
        %v451 = vld [vmem:[%s220] sm:$0xff]
        %v452 = vld [vmem:[%s220 + $0x8] sm:$0xff]
        %v453 = vld [vmem:[%s220 + $0x10] sm:$0xff]
        %v454 = vld [vmem:[%s220 + $0x18] sm:$0xff]
        %v455 = vld [vmem:[%s220 + $0x20] sm:$0xff]
        %v456 = vld [vmem:[%s220 + $0x28] sm:$0xff]
        %v457 = vld [vmem:[%s220 + $0x30] sm:$0xff]
        %v458 = vld [vmem:[%s220 + $0x38] sm:$0xff]
        %v459 = vld [vmem:[%s220 + $0x40] sm:$0xff]
        %v460 = vld [vmem:[%s220 + $0x48] sm:$0xff]
        %v461 = vld [vmem:[%s220 + $0x50] sm:$0xff]
        %v462 = vld [vmem:[%s220 + $0x58] sm:$0xff]
        %v463 = vld [vmem:[%s220 + $0x60] sm:$0xff]
        %v464 = vld [vmem:[%s220 + $0x68] sm:$0xff]
        %v465 = vld [vmem:[%s220 + $0x70] sm:$0xff]
        %v466 = vld [vmem:[%s220 + $0x78] sm:$0xff]
        %v467 = vld [vmem:[%s220 + $0x80] sm:$0xff]
        %v468 = vld [vmem:[%s220 + $0x88] sm:$0xff]
        %v469 = vld [vmem:[%s220 + $0x90] sm:$0xff]
        %v470 = vld [vmem:[%s220 + $0x98] sm:$0xff]
        %v471 = vld [vmem:[%s220 + $0xa0] sm:$0xff]
        %v472 = vld [vmem:[%s220 + $0xa8] sm:$0xff]
        %v473 = vld [vmem:[%s220 + $0xb0] sm:$0xff]
        %v474 = vld [vmem:[%s220 + $0xb8] sm:$0xff]
        %v475 = vld [vmem:[%s220 + $0xc0] sm:$0xff]
        %v476 = vld [vmem:[%s220 + $0xc8] sm:$0xff]
        %v477 = vld [vmem:[%s220 + $0xd0] sm:$0xff]
        %v478 = vld [vmem:[%s220 + $0xd8] sm:$0xff]
        %v479 = vld [vmem:[%s220 + $0xe0] sm:$0xff]
        %v480 = vld [vmem:[%s220 + $0xe8] sm:$0xff]
        %v481 = vld [vmem:[%s220 + $0xf0] sm:$0xff]
        %v482 = vld [vmem:[%s220 + $0xf8] sm:$0xff]
        %483 = vmatprep.subr.mxu0 0.0
        %484 = vmatpush1.msra.mxu0 %v466
        %485 = vmatprep.subr.mxu0 0.0
        %486 = vmatpush1.msra.mxu0 %v465
        %487 = vmatprep.subr.mxu0 0.0
        %488 = vmatpush1.msra.mxu0 %v464
        %489 = vmatprep.subr.mxu0 0.0
        %490 = vmatpush1.msra.mxu0 %v463
        %491 = vmatprep.subr.mxu0 0.0
        %492 = vmatpush1.msra.mxu0 %v462
        %493 = vmatprep.subr.mxu0 0.0
        %494 = vmatpush1.msra.mxu0 %v461
        %495 = vmatprep.subr.mxu0 0.0
        %496 = vmatpush1.msra.mxu0 %v460
        %497 = vmatprep.subr.mxu0 0.0
        %498 = vmatpush1.msra.mxu0 %v459
        %499 = vmatprep.subr.mxu0 0.0
        %500 = vmatpush1.msra.mxu0 %v458
        %501 = vmatprep.subr.mxu0 0.0
        %502 = vmatpush1.msra.mxu0 %v457
        %503 = vmatprep.subr.mxu0 0.0
        %504 = vmatpush1.msra.mxu0 %v456
        %505 = vmatprep.subr.mxu0 0.0
        %506 = vmatpush1.msra.mxu0 %v455
        %507 = vmatprep.subr.mxu0 0.0
        %508 = vmatpush1.msra.mxu0 %v454
        %509 = vmatprep.subr.mxu0 0.0
        %510 = vmatpush1.msra.mxu0 %v453
        %511 = vmatprep.subr.mxu0 0.0
        %512 = vmatpush1.msra.mxu0 %v452
        %513 = vmatprep.subr.mxu0 0.0
        %514 = vmatpush1.msra.mxu0 %v451
        %515 = vmatprep.subr.mxu0 0.0
        %516 = vmatpush2.msra.mxu0 %v482
        %517 = vmatprep.subr.mxu0 0.0
        %518 = vmatpush2.msra.mxu0 %v481
        %519 = vmatprep.subr.mxu0 0.0
        %520 = vmatpush2.msra.mxu0 %v480
        %521 = vmatprep.subr.mxu0 0.0
        %522 = vmatpush2.msra.mxu0 %v479
        %523 = vmatprep.subr.mxu0 0.0
        %524 = vmatpush2.msra.mxu0 %v478
        %525 = vmatprep.subr.mxu0 0.0
        %526 = vmatpush2.msra.mxu0 %v477
        %527 = vmatprep.subr.mxu0 0.0
        %528 = vmatpush2.msra.mxu0 %v476
        %529 = vmatprep.subr.mxu0 0.0
        %530 = vmatpush2.msra.mxu0 %v475
        %531 = vmatprep.subr.mxu0 0.0
        %532 = vmatpush2.msra.mxu0 %v474
        %533 = vmatprep.subr.mxu0 0.0
        %534 = vmatpush2.msra.mxu0 %v473
        %535 = vmatprep.subr.mxu0 0.0
        %536 = vmatpush2.msra.mxu0 %v472
        %537 = vmatprep.subr.mxu0 0.0
        %538 = vmatpush2.msra.mxu0 %v471
        %539 = vmatprep.subr.mxu0 0.0
        %540 = vmatpush2.msra.mxu0 %v470
        %541 = vmatprep.subr.mxu0 0.0
        %542 = vmatpush2.msra.mxu0 %v469
        %543 = vmatprep.subr.mxu0 0.0
        %544 = vmatpush2.msra.mxu0 %v468
        %545 = vmatprep.subr.mxu0 0.0
        %546 = vmatpush2.msra.mxu0 %v467
        %547 = vmatprep.mubr.f32.mxu0 %v449
        %548 = vmatmul.mubr.f32.gmra.mxu0 %v448
        %v549 = vpop.f32.mrf.mxu0
        %v550 = vadd.f32 0.0, %v549
        %v551 = vpop.f32.mrf.mxu0
        %552 = vdwg.mxu0
        %v553 = vadd.f32 %v450, %v550
        %554 = vst [vmem:[%s205] sm:$0xff] %v553
        %s555 = sand.u32 %s115, 1
        %s556 = scalar_lea.sflag [#allocation3], %s555
        %s557 = sand.u32 %s115, 1
        %s558 = smul.addr %s557, 8
        %s559 = scalar_lea.vmem [#allocation2], %s558
        // Predicated region
        $region37: #{mlp_pallas.1} parent=31 // pred_check
          %p560 = pneg %p125
        $region38: #{mlp_pallas.1} parent=31 // pred_check_branch
          %562 = sbr.rel (%p560) target = $region40
        $region39: #{mlp_pallas.1} parent=31 // pred_region
          %s564 = ssub.s32 128, 128
          %565 = vsyncadd %s556, %s564
          %s566 = smul.addr %s21, 128
          %s567 = scalar_lea.hbm %s3, %s566
          %s569 = sshll.u32 %s559, 4
          %s570 = int_to_ptr.vmem [resolvable:$true] %s569
          %572 = dma.vmem_to_hbm [thread:$0]  %s570, 128, %s567, %s556
        $region40: #{mlp_pallas.1} parent=31 // pred_fallthru
          _
      $region32: #{mlp_pallas.1} parent=5 // pred_fallthru
        _
      %p573 = scmp.le.s32.totalorder 2, %s12
      // Predicated region
      $region41: #{mlp_pallas.1} parent=5 // pred_check
        %p574 = pneg %p573
      $region42: #{mlp_pallas.1} parent=5 // pred_check_branch
        %576 = sbr.rel (%p574) target = $region44
      $region43: #{mlp_pallas.1} parent=5 // pred_region
        %s577 = ssub.s32 %s12, 2
        // Predicated region
        $region45: #{mlp_pallas.1} parent=43 // pred_check
          %p578 = pneg %p131
        $region46: #{mlp_pallas.1} parent=43 // pred_check_branch
          %580 = sbr.rel (%p578) target = $region48
        $region47: #{mlp_pallas.1} parent=43 // pred_region
          %s581 = sand.u32 %s116, 1
          %s582 = scalar_lea.sflag [#allocation3], %s581
          %s583 = sand.u32 %s116, 1
          %s584 = smul.addr %s583, 8
          %s585 = scalar_lea.vmem [#allocation2], %s584
          %586 = dma.done %s582, 128
        $region48: #{mlp_pallas.1} parent=43 // pred_fallthru
          _
      $region44: #{mlp_pallas.1} parent=5 // pred_fallthru
        _
    $region6: #{mlp_pallas.1} parent=1 // loop_footer
      %s16 = sadd.s32 1, %s12
    $region7: #{mlp_pallas.1} parent=1 // loop_footer_branch
      %11 = sbr.rel target = $region3
    $region8: #{mlp_pallas.1} parent=1 // loop_exit
      _
    %587 = vsyncpa [#allocation3], 1
    %s588 = scalar_lea.sflag [#allocation3], 1
    %589 = vsyncpa %s588, 1

</llo_original>
